<compile_context>
chip_gen: v5e
topology: v5e:2x2
jax: 0.10.0
libtpu: 0.0.40
codegen_flags: <defaults>
</compile_context>

<pallas_src>
import functools

import jax
import jax.numpy as jnp
import numpy as np
from jax import lax
from jax.experimental import pallas as pl
from jax.experimental.pallas import tpu as pltpu


def _maxpool2x2_kernel(x_ref, se_ref, so_ref, o_ref, *, W, precision):
    # x_ref : (br, 2*W)  -- row r = [image row 2i | image row 2i+1]
    # se_ref: (W, Wo)    -- 0/1 matrix selecting even columns
    # so_ref: (W, Wo)    -- 0/1 matrix selecting odd columns
    # o_ref : (br, Wo)
    x = x_ref[...]
    vm = jnp.maximum(x[:, :W], x[:, W:])          # vertical pair max (VPU)
    he = jnp.dot(vm, se_ref[...], precision=precision,
                 preferred_element_type=jnp.float32)
    ho = jnp.dot(vm, so_ref[...], precision=precision,
                 preferred_element_type=jnp.float32)
    o_ref[...] = jnp.maximum(he, ho).astype(o_ref.dtype)


@functools.lru_cache(maxsize=None)
def _selection_matrices(W, Wo, dtype_name):
    """Two 0/1 matrices (W, Wo): Se picks column 2j, So picks column 2j+1.
    A trailing odd column (W odd) is simply never selected (floor semantics)."""
    se = np.zeros((W, Wo), dtype=np.float32)
    so = np.zeros((W, Wo), dtype=np.float32)
    cols = np.arange(Wo)
    se[2 * cols, cols] = 1.0
    so[2 * cols + 1, cols] = 1.0
    dt = jnp.dtype(dtype_name)
    return jnp.asarray(se, dtype=dt), jnp.asarray(so, dtype=dt)


def maxpool2d_2x2(x, *, target_block_bytes=4 << 20):
    """x: (N, C, H, W) -> (N, C, H//2, W//2), matching nn.MaxPool2d(2, 2)."""
    N, C, H, W = x.shape
    Ho, Wo = H // 2, W // 2
    orig_dtype = x.dtype

    if H % 2:
        # Floor semantics drop the trailing odd row; only costs an extra HBM
        # pass in the (rare) odd-H case.
        # TODO(synk): fold the odd-row drop into the block index_map instead.
        x = x[:, :, : 2 * Ho, :]

    M = N * C
    R = M * Ho                       # rows of the (R, 2W) slab (1 per output row)

    # bf16 stays bf16 end-to-end (single MXU pass); everything else goes
    # through an exact f32 path (selection entries are 0/1, HIGHEST precision
    # reproduces the gathered values bit-exactly).
    if x.dtype == jnp.bfloat16:
        s_dtype, precision = jnp.bfloat16, None
    else:
        if x.dtype != jnp.float32:
            x = x.astype(jnp.float32)
        s_dtype, precision = jnp.float32, lax.Precision.HIGHEST
    itemsize = jnp.dtype(x.dtype).itemsize

    x2 = x.reshape(R, 2 * W)         # free row-major reshape -> lane-dense rows
    se, so = _selection_matrices(W, Wo, jnp.dtype(s_dtype).name)

    # Block sizing: ~target_block_bytes of input per grid step, sublane-packed
    # alignment, and >=2 grid steps when possible so the parallel axis can
    # shard across both TensorCores on v7x.
    pack = {1: 32, 2: 16}.get(itemsize, 8)
    row_bytes = 2 * W * itemsize
    br = max(1, target_block_bytes // row_bytes)
    if br >= R:
        if R >= 2 * pack:
            br = ((R + 2 * pack - 1) // (2 * pack)) * pack   # ~R/2, pack-aligned
        else:
            br = R
    else:
        br = max(pack, (br // pack) * pack)
    br = min(br, R)
    grid = (pl.cdiv(R, br),)

    # Explicit VMEM budget: double-buffered in/out blocks + both (tiny) S
    # buffers + headroom for kernel intermediates; capped under v7x's 64 MiB.
    in_blk = br * 2 * W * itemsize
    out_blk = br * Wo * itemsize
    s_bytes = 2 * W * Wo * jnp.dtype(s_dtype).itemsize
    vmem_need = 2 * (in_blk + out_blk) + 2 * s_bytes + in_blk + (4 << 20)
    vmem_limit = int(min(56 << 20, max(16 << 20, vmem_need)))

    cost = pl.CostEstimate(
        flops=4 * R * W * Wo + 2 * R * W,
        transcendentals=0,
        bytes_accessed=(R * 2 * W + R * Wo) * itemsize + 2 * s_bytes,
    )

    kernel = functools.partial(_maxpool2x2_kernel, W=W, precision=precision)
    out_flat = pl.pallas_call(
        kernel,
        out_shape=jax.ShapeDtypeStruct((R, Wo), orig_dtype),
        grid=grid,
        in_specs=[
            pl.BlockSpec((br, 2 * W), lambda i: (i, 0)),
            pl.BlockSpec((W, Wo), lambda i: (0, 0)),   # constant block -> stays resident
            pl.BlockSpec((W, Wo), lambda i: (0, 0)),
        ],
        out_specs=pl.BlockSpec((br, Wo), lambda i: (i, 0)),
        compiler_params=pltpu.CompilerParams(
            dimension_semantics=("parallel",),
            vmem_limit_bytes=vmem_limit,
        ),
        cost_estimate=cost,
    )(x2, se, so)

    return out_flat.reshape(N, C, Ho, Wo)


if __name__ == "__main__":
    key = jax.random.PRNGKey(0)
    x = jax.random.normal(key, (2, 4, 16, 16), dtype=jnp.float32)

    out = jax.block_until_ready(maxpool2d_2x2(x))

    # Pure-JAX reference for 2x2 / stride-2 max pooling.
    N, C, H, W = x.shape
    ref = jnp.max(x.reshape(N, C, H // 2, 2, W // 2, 2), axis=(3, 5))
    assert out.shape == (2, 4, 8, 8), out.shape
    assert jnp.allclose(out, ref), "mismatch vs reference max pool"

    print("KERNEL_OK")
</pallas_src>

<mosaic_0001>
module attributes {stable_mosaic.version = 11 : i64} {
  func.func @_maxpool2x2_kernel(%arg0: i32, %arg1: memref<32x32xf32, #tpu.memory_space<vmem>>, %arg2: memref<16x8xf32, #tpu.memory_space<vmem>>, %arg3: memref<16x8xf32, #tpu.memory_space<vmem>>, %arg4: memref<32x8xf32, #tpu.memory_space<vmem>>) attributes {dimension_semantics = [#tpu.dimension_semantics<parallel>], iteration_bounds = array<i64: 2>, scalar_prefetch = 0 : i64, scratch_operands = 0 : i64, tpu.core_type = #tpu.core_type<tc>, window_params = [{transform_indices = @transform_0, window_bounds = array<i64: 32, 32>}, {pipeline_mode = #tpu.pipeline_mode<synchronous>, transform_indices = @transform_1, window_bounds = array<i64: 16, 8>}, {pipeline_mode = #tpu.pipeline_mode<synchronous>, transform_indices = @transform_2, window_bounds = array<i64: 16, 8>}, {transform_indices = @transform_3, window_bounds = array<i64: 32, 8>}]} {
    %c0 = arith.constant 0 : index
    %c0_0 = arith.constant 0 : index
    %0 = vector.load %arg1[%c0, %c0_0] : memref<32x32xf32, #tpu.memory_space<vmem>>, vector<32x32xf32>
    %1 = vector.extract_strided_slice %0 {offsets = [0, 0], sizes = [32, 16], strides = [1, 1]} : vector<32x32xf32> to vector<32x16xf32>
    %2 = vector.extract_strided_slice %0 {offsets = [0, 16], sizes = [32, 16], strides = [1, 1]} : vector<32x32xf32> to vector<32x16xf32>
    %3 = arith.maximumf %1, %2 : vector<32x16xf32>
    %c0_1 = arith.constant 0 : index
    %c0_2 = arith.constant 0 : index
    %4 = vector.load %arg2[%c0_1, %c0_2] : memref<16x8xf32, #tpu.memory_space<vmem>>, vector<16x8xf32>
    %cst = arith.constant dense<0.000000e+00> : vector<32x8xf32>
    %5 = tpu.matmul %3, %4, %cst {dimension_numbers = #tpu.dot_dimension_numbers<[1], [0], [0], [1], [0, 0, 1, 1], [], []>, precision = #tpu.contract_precision<fp32>} : vector<32x16xf32>, vector<16x8xf32>, vector<32x8xf32> -> vector<32x8xf32>
    %c0_3 = arith.constant 0 : index
    %c0_4 = arith.constant 0 : index
    %6 = vector.load %arg3[%c0_3, %c0_4] : memref<16x8xf32, #tpu.memory_space<vmem>>, vector<16x8xf32>
    %cst_5 = arith.constant dense<0.000000e+00> : vector<32x8xf32>
    %7 = tpu.matmul %3, %6, %cst_5 {dimension_numbers = #tpu.dot_dimension_numbers<[1], [0], [0], [1], [0, 0, 1, 1], [], []>, precision = #tpu.contract_precision<fp32>} : vector<32x16xf32>, vector<16x8xf32>, vector<32x8xf32> -> vector<32x8xf32>
    %8 = arith.maximumf %5, %7 : vector<32x8xf32>
    %c0_6 = arith.constant 0 : index
    %c0_7 = arith.constant 0 : index
    %9 = vector.load %arg4[%c0_6, %c0_7] : memref<32x8xf32, #tpu.memory_space<vmem>>, vector<32x8xf32>
    tpu.vector_store %arg4[%c0_6, %c0_7], %8 {strides = array<i32>} : memref<32x8xf32, #tpu.memory_space<vmem>>, vector<32x8xf32>,
    return
  }
  func.func @transform_0(%arg0: i32) -> (i32, i32) {
    %c0_i32 = arith.constant 0 : i32
    %c0_i32_0 = arith.constant 0 : i32
    return %arg0, %c0_i32 : i32, i32
  }
  func.func @transform_1(%arg0: i32) -> (i32, i32) {
    %c0_i32 = arith.constant 0 : i32
    %c0_i32_0 = arith.constant 0 : i32
    %c0_i32_1 = arith.constant 0 : i32
    return %c0_i32, %c0_i32_0 : i32, i32
  }
  func.func @transform_2(%arg0: i32) -> (i32, i32) {
    %c0_i32 = arith.constant 0 : i32
    %c0_i32_0 = arith.constant 0 : i32
    %c0_i32_1 = arith.constant 0 : i32
    return %c0_i32, %c0_i32_0 : i32, i32
  }
  func.func @transform_3(%arg0: i32) -> (i32, i32) {
    %c0_i32 = arith.constant 0 : i32
    %c0_i32_0 = arith.constant 0 : i32
    return %arg0, %c0_i32 : i32, i32
  }
}

</mosaic_0001>

<llo_original>
// kernel: tpu_custom_call.1
$region0: #{tpu_custom_call.1}
  #allocation0 [shape = 'u32[]', space=smem, size = 0x4, offset = 0x4, fixed_abs, tag = 'smem constant byte address 0x4 - core index']
  #allocation1 [shape = 'u32[72,128]{1,0:T(1,128)}', space=vmem, size = 0x9000, scoped, tag = 'internal scratch']
  %s0 = inlined_call_operand.vmem [shape: f32[64,32], index: 0, kind: input, shape index: {}]
  %s1 = inlined_call_operand.vmem [shape: f32[16,8], index: 1, kind: input, shape index: {}]
  %s2 = inlined_call_operand.vmem [shape: f32[16,8], index: 2, kind: input, shape index: {}]
  %s3 = inlined_call_operand.vmem [shape: f32[64,8], index: 3, kind: output, shape index: {}]
  %s4 = sld [smem:[#allocation0]]
  $region45: #{tpu_custom_call.1} parent=0
    _
  %s6 = ssub.s32 1, %s4
  %s7 = scalar_select 0, %s6, %s4
  loop: start=0, step=1, limit=4
  $region2: #{tpu_custom_call.1} parent=0 // loop_pre_header
    _
  $region3: #{tpu_custom_call.1} parent=0 // loop_header
    %s9 = sphi 0, %s13
    %p10 = scmp.ge.s32.totalorder %s9, 4
    %s19 = sphi 0, %s21
    %s22 = sphi 0, %s19
    %s23 = sphi 0, %s22
    %s39 = sphi 0, %s23
    %s43 = sphi 0, %s43
    %s45 = sphi 0, %s43
    %s46 = sphi 0, %s45
    %s60 = sphi 0, %s46
    %s64 = sphi 0, %s64
    %s66 = sphi 0, %s64
    %s67 = sphi 0, %s66
    %s81 = sphi 0, %s67
    %s87 = sphi 0, %s89
    %s90 = sphi 0, %s87
    %s91 = sphi 0, %s90
    %s107 = sphi 0, %s91
  $region4: #{tpu_custom_call.1} parent=0 // loop_header_branch
    %12 = sbr.rel (%p10) target = $region8
  $region5: #{tpu_custom_call.1} parent=0 // loop_body
    %s14 = ssub.s32 %s9, 1
    %s15 = ssub.s32 %s9, 2
    %s16 = sadd.s32 %s9, 1
    %s17 = ssub.s32 %s9, %s16
    %p18 = scmp.eq.s32.totalorder %s17, 0
    %s20 = sadd.s32 %s19, 1
    %s21 = scalar_select %p18, %s19, %s20
    %p24 = pneg %p18
    %p25 = scmp.eq.s32.totalorder %s9, 1
    %p26 = por %p24, %p25
    %p27 = scmp.ne.s32.totalorder %s19, %s22
    %p28 = scmp.eq.s32.totalorder %s9, 0
    %p29 = por %p27, %p28
    %p30 = scmp.ne.s32.totalorder %s19, %s22
    %p31 = scmp.eq.s32.totalorder %s14, 1
    %p32 = por %p30, %p31
    %p33 = scmp.ne.s32.totalorder %s22, %s23
    %p34 = scmp.eq.s32.totalorder %s14, 0
    %p35 = por %p33, %p34
    %p36 = scmp.ne.s32.totalorder %s22, %s23
    %p37 = scmp.eq.s32.totalorder %s15, 1
    %p38 = por %p36, %p37
    %p40 = scmp.ne.s32.totalorder %s23, %s39
    %p41 = scmp.eq.s32.totalorder %s15, 0
    %p42 = por %p40, %p41
    %s44 = sadd.s32 %s43, 1
    %p47 = scmp.eq.s32.totalorder %s9, 1
    %p48 = scmp.ne.s32.totalorder %s43, %s45
    %p49 = scmp.eq.s32.totalorder %s9, 0
    %p50 = por %p48, %p49
    %p51 = scmp.ne.s32.totalorder %s43, %s45
    %p52 = scmp.eq.s32.totalorder %s14, 1
    %p53 = por %p51, %p52
    %p54 = scmp.ne.s32.totalorder %s45, %s46
    %p55 = scmp.eq.s32.totalorder %s14, 0
    %p56 = por %p54, %p55
    %p57 = scmp.ne.s32.totalorder %s45, %s46
    %p58 = scmp.eq.s32.totalorder %s15, 1
    %p59 = por %p57, %p58
    %p61 = scmp.ne.s32.totalorder %s46, %s60
    %p62 = scmp.eq.s32.totalorder %s15, 0
    %p63 = por %p61, %p62
    %s65 = sadd.s32 %s64, 1
    %p68 = scmp.eq.s32.totalorder %s9, 1
    %p69 = scmp.ne.s32.totalorder %s64, %s66
    %p70 = scmp.eq.s32.totalorder %s9, 0
    %p71 = por %p69, %p70
    %p72 = scmp.ne.s32.totalorder %s64, %s66
    %p73 = scmp.eq.s32.totalorder %s14, 1
    %p74 = por %p72, %p73
    %p75 = scmp.ne.s32.totalorder %s66, %s67
    %p76 = scmp.eq.s32.totalorder %s14, 0
    %p77 = por %p75, %p76
    %p78 = scmp.ne.s32.totalorder %s66, %s67
    %p79 = scmp.eq.s32.totalorder %s15, 1
    %p80 = por %p78, %p79
    %p82 = scmp.ne.s32.totalorder %s67, %s81
    %p83 = scmp.eq.s32.totalorder %s15, 0
    %p84 = por %p82, %p83
    %s85 = ssub.s32 %s9, %s16
    %p86 = scmp.eq.s32.totalorder %s85, 0
    %s88 = sadd.s32 %s87, 1
    %s89 = scalar_select %p86, %s87, %s88
    %p92 = pneg %p86
    %p93 = scmp.eq.s32.totalorder %s9, 1
    %p94 = por %p92, %p93
    %p95 = scmp.ne.s32.totalorder %s87, %s90
    %p96 = scmp.eq.s32.totalorder %s9, 0
    %p97 = por %p95, %p96
    %p98 = scmp.ne.s32.totalorder %s87, %s90
    %p99 = scmp.eq.s32.totalorder %s14, 1
    %p100 = por %p98, %p99
    %p101 = scmp.ne.s32.totalorder %s90, %s91
    %p102 = scmp.eq.s32.totalorder %s14, 0
    %p103 = por %p101, %p102
    %p104 = scmp.ne.s32.totalorder %s90, %s91
    %p105 = scmp.eq.s32.totalorder %s15, 1
    %p106 = por %p104, %p105
    %p108 = scmp.ne.s32.totalorder %s91, %s107
    %p109 = scmp.eq.s32.totalorder %s15, 0
    %p110 = por %p108, %p109
    %p111 = scmp.le.s32.totalorder 1, %s9
    %p112 = scmp.lt.s32.totalorder %s9, 3
    %p113 = pnand %p111, %p112
    %p114 = pneg %p113
    // Predicated region
    $region9: #{tpu_custom_call.1} parent=5 // pred_check
      _
    $region10: #{tpu_custom_call.1} parent=5 // pred_check_branch
      %116 = sbr.rel (%p113) target = $region12
    $region11: #{tpu_custom_call.1} parent=5 // pred_region
      %s117 = ssub.s32 %s9, 1
      // Predicated region
      $region13: #{tpu_custom_call.1} parent=11 // pred_check
        %p118 = pneg %p56
      $region14: #{tpu_custom_call.1} parent=11 // pred_check_branch
        %120 = sbr.rel (%p118) target = $region16
      $region15: #{tpu_custom_call.1} parent=11 // pred_region
        _
      $region16: #{tpu_custom_call.1} parent=11 // pred_fallthru
        _
      // Predicated region
      $region17: #{tpu_custom_call.1} parent=11 // pred_check
        %p121 = pneg %p77
      $region18: #{tpu_custom_call.1} parent=11 // pred_check_branch
        %123 = sbr.rel (%p121) target = $region20
      $region19: #{tpu_custom_call.1} parent=11 // pred_region
        _
      $region20: #{tpu_custom_call.1} parent=11 // pred_fallthru
        _
    $region12: #{tpu_custom_call.1} parent=5 // pred_fallthru
      _
    %p124 = scmp.lt.s32.totalorder %s9, 2
    // Predicated region
    $region21: #{tpu_custom_call.1} parent=5 // pred_check
      %p125 = pneg %p124
    $region22: #{tpu_custom_call.1} parent=5 // pred_check_branch
      %127 = sbr.rel (%p125) target = $region24
    $region23: #{tpu_custom_call.1} parent=5 // pred_region
      // Predicated region
      $region25: #{tpu_custom_call.1} parent=23 // pred_check
        %p128 = pneg %p29
      $region26: #{tpu_custom_call.1} parent=23 // pred_check_branch
        %130 = sbr.rel (%p128) target = $region28
      $region27: #{tpu_custom_call.1} parent=23 // pred_region
        %s131 = smul.u32 4, %s9
        %p132 = scmp.lt.s32.totalorder %s131, 7
        %s133 = scalar_select %p132, %s131, 7
        %s134 = smul.addr %s133, 8
        %s135 = scalar_lea.vmem %s0, %s134
        %s136 = smul.u32 4, %s9
      $region28: #{tpu_custom_call.1} parent=23 // pred_fallthru
        _
    $region24: #{tpu_custom_call.1} parent=5 // pred_fallthru
      _
    %p137 = scmp.le.s32.totalorder 1, %s9
    %p138 = scmp.lt.s32.totalorder %s9, 3
    %p139 = pnand %p137, %p138
    %p140 = pneg %p139
    // Predicated region
    $region29: #{tpu_custom_call.1} parent=5 // pred_check
      _
    $region30: #{tpu_custom_call.1} parent=5 // pred_check_branch
      %142 = sbr.rel (%p139) target = $region32
    $region31: #{tpu_custom_call.1} parent=5 // pred_region
      %s143 = ssub.s32 %s9, 1
      %s144 = smul.u32 4, %s14
      %p145 = scmp.lt.s32.totalorder %s144, 7
      %s146 = scalar_select %p145, %s144, 7
      %s147 = smul.addr %s146, 8
      %s148 = scalar_lea.vmem %s0, %s147
      %p149 = pneg %p35
      %p150 = pneg %p32
      %p151 = pneg %p56
      %p152 = pneg %p53
      %p153 = pneg %p77
      %p154 = pneg %p74
      %p155 = pneg %p103
      %p156 = pneg %p100
      %s157 = smul.u32 4, %s14
      %p158 = scmp.lt.s32.totalorder %s157, 7
      %s159 = scalar_select %p158, %s157, 7
      %s160 = smul.addr %s159, 8
      %s161 = scalar_lea.vmem %s3, %s160
      %s162 = smul.u32 4, %s14
      %p163 = scmp.lt.s32.totalorder %s162, 7
      %s164 = scalar_select %p163, %s162, 7
      %s165 = smul.addr %s164, 8
      %s166 = scalar_lea.vmem %s0, %s165
      %s167 = smul.u32 4, %s14
      %s168 = smul.u32 4, %s14
      %p169 = scmp.lt.s32.totalorder %s168, 7
      %s170 = scalar_select %p169, %s168, 7
      %s171 = smul.addr %s170, 8
      %s172 = scalar_lea.vmem %s3, %s171
      %s173 = smul.u32 4, %s14
      %v174 = vld [vmem:[%s166] sm:$0xff]
      %v175 = vld [vmem:[%s166 + $0x8] sm:$0xff]
      %v176 = vld [vmem:[%s166 + $0x10] sm:$0xff]
      %v177 = vld [vmem:[%s166 + $0x18] sm:$0xff]
      %182 = vrot.lane.b32.xlu0 %v174, 112
      %v183 = vpop.permute.xlu0 %182
      %184 = vrot.lane.b32.xlu0 %v175, 112
      %v185 = vpop.permute.xlu0 %184
      %186 = vrot.lane.b32.xlu0 %v176, 112
      %v187 = vpop.permute.xlu0 %186
      %188 = vrot.lane.b32.xlu0 %v177, 112
      %v189 = vpop.permute.xlu0 %188
      %v194 = vmax.f32 %v174, %v183
      %v195 = vmax.f32 %v175, %v185
      %v196 = vmax.f32 %v176, %v187
      %v197 = vmax.f32 %v177, %v189
      %v198 = vld [vmem:[%s1] sm:$0xff]
      %v199 = vld [vmem:[%s1 + $0x8] sm:$0xff]
      %vm200 = vcmask 130048
      %v202 = vsel %vm200, %v194, 0
      %v205 = vsel %vm200, %v195, 0
      %v208 = vsel %vm200, %v196, 0
      %v211 = vsel %vm200, %v197, 0
      %213 = vmatpush.msra.mxu0 0.0
      %214 = vmatpush.msra.mxu0 0.0
      %215 = vmatpush.msra.mxu0 0.0
      %216 = vmatpush.msra.mxu0 0.0
      %217 = vmatpush.msra.mxu0 0.0
      %218 = vmatpush.msra.mxu0 0.0
      %219 = vmatpush.msra.mxu0 0.0
      %220 = vmatpush.msra.mxu0 0.0
      %221 = vmatpush.msra.mxu0 0.0
      %222 = vmatpush.msra.mxu0 0.0
      %223 = vmatpush.msra.mxu0 0.0
      %224 = vmatpush.msra.mxu0 0.0
      %225 = vmatpush.msra.mxu0 0.0
      %226 = vmatpush.msra.mxu0 0.0
      %v227 = vand.u32 %v199, 4294901760
      %228 = vmatpush.msra.mxu0 %v227
      %v229 = vand.u32 %v198, 4294901760
      %230 = vmatpush.msra.mxu0 %v229
      %v231 = vand.u32 %v202, 4294901760
      %v232 = vsub.f32 %v202, %v231
      %v233 = vand.u32 %v232, 4294901760
      %v234 = vsub.f32 %v232, %v233
      %v235 = vand.u32 %v234, 4294901760
      %236 = vmatmul.f32.gmra.mxu0 %v235
      %v237 = vpop.f32.mrf.mxu0
      %v238 = vadd.f32 0.0, %v237
      %v239 = vand.u32 %v205, 4294901760
      %v240 = vsub.f32 %v205, %v239
      %v241 = vand.u32 %v240, 4294901760
      %v242 = vsub.f32 %v240, %v241
      %v243 = vand.u32 %v242, 4294901760
      %244 = vmatmul.f32.gmra.mxu0 %v243
      %v245 = vpop.f32.mrf.mxu0
      %v246 = vadd.f32 0.0, %v245
      %v247 = vand.u32 %v208, 4294901760
      %v248 = vsub.f32 %v208, %v247
      %v249 = vand.u32 %v248, 4294901760
      %v250 = vsub.f32 %v248, %v249
      %v251 = vand.u32 %v250, 4294901760
      %252 = vmatmul.f32.gmra.mxu0 %v251
      %v253 = vpop.f32.mrf.mxu0
      %v254 = vadd.f32 0.0, %v253
      %v255 = vand.u32 %v211, 4294901760
      %v256 = vsub.f32 %v211, %v255
      %v257 = vand.u32 %v256, 4294901760
      %v258 = vsub.f32 %v256, %v257
      %v259 = vand.u32 %v258, 4294901760
      %260 = vmatmul.f32.gmra.mxu0 %v259
      %v261 = vpop.f32.mrf.mxu0
      %v262 = vadd.f32 0.0, %v261
      %263 = vdwg.mxu0
      %264 = vmatpush.msra.mxu0 0.0
      %265 = vmatpush.msra.mxu0 0.0
      %266 = vmatpush.msra.mxu0 0.0
      %267 = vmatpush.msra.mxu0 0.0
      %268 = vmatpush.msra.mxu0 0.0
      %269 = vmatpush.msra.mxu0 0.0
      %270 = vmatpush.msra.mxu0 0.0
      %271 = vmatpush.msra.mxu0 0.0
      %272 = vmatpush.msra.mxu0 0.0
      %273 = vmatpush.msra.mxu0 0.0
      %274 = vmatpush.msra.mxu0 0.0
      %275 = vmatpush.msra.mxu0 0.0
      %276 = vmatpush.msra.mxu0 0.0
      %277 = vmatpush.msra.mxu0 0.0
      %v278 = vand.u32 %v199, 4294901760
      %v279 = vsub.f32 %v199, %v278
      %v280 = vand.u32 %v279, 4294901760
      %v281 = vsub.f32 %v279, %v280
      %v282 = vand.u32 %v281, 4294901760
      %283 = vmatpush.msra.mxu0 %v282
      %v284 = vand.u32 %v198, 4294901760
      %v285 = vsub.f32 %v198, %v284
      %v286 = vand.u32 %v285, 4294901760
      %v287 = vsub.f32 %v285, %v286
      %v288 = vand.u32 %v287, 4294901760
      %289 = vmatpush.msra.mxu0 %v288
      %v290 = vand.u32 %v202, 4294901760
      %291 = vmatmul.f32.gmra.mxu0 %v290
      %v292 = vpop.f32.mrf.mxu0
      %v293 = vadd.f32 %v238, %v292
      %v294 = vand.u32 %v205, 4294901760
      %295 = vmatmul.f32.gmra.mxu0 %v294
      %v296 = vpop.f32.mrf.mxu0
      %v297 = vadd.f32 %v246, %v296
      %v298 = vand.u32 %v208, 4294901760
      %299 = vmatmul.f32.gmra.mxu0 %v298
      %v300 = vpop.f32.mrf.mxu0
      %v301 = vadd.f32 %v254, %v300
      %v302 = vand.u32 %v211, 4294901760
      %303 = vmatmul.f32.gmra.mxu0 %v302
      %v304 = vpop.f32.mrf.mxu0
      %v305 = vadd.f32 %v262, %v304
      %306 = vdwg.mxu0
      %307 = vmatpush.msra.mxu0 0.0
      %308 = vmatpush.msra.mxu0 0.0
      %309 = vmatpush.msra.mxu0 0.0
      %310 = vmatpush.msra.mxu0 0.0
      %311 = vmatpush.msra.mxu0 0.0
      %312 = vmatpush.msra.mxu0 0.0
      %313 = vmatpush.msra.mxu0 0.0
      %314 = vmatpush.msra.mxu0 0.0
      %315 = vmatpush.msra.mxu0 0.0
      %316 = vmatpush.msra.mxu0 0.0
      %317 = vmatpush.msra.mxu0 0.0
      %318 = vmatpush.msra.mxu0 0.0
      %319 = vmatpush.msra.mxu0 0.0
      %320 = vmatpush.msra.mxu0 0.0
      %v321 = vand.u32 %v199, 4294901760
      %v322 = vsub.f32 %v199, %v321
      %323 = vmatpush.msra.mxu0 %v322
      %v324 = vand.u32 %v198, 4294901760
      %v325 = vsub.f32 %v198, %v324
      %326 = vmatpush.msra.mxu0 %v325
      %v327 = vand.u32 %v202, 4294901760
      %v328 = vsub.f32 %v202, %v327
      %329 = vmatmul.f32.gmra.mxu0 %v328
      %v330 = vpop.f32.mrf.mxu0
      %v331 = vadd.f32 %v293, %v330
      %v332 = vand.u32 %v205, 4294901760
      %v333 = vsub.f32 %v205, %v332
      %334 = vmatmul.f32.gmra.mxu0 %v333
      %v335 = vpop.f32.mrf.mxu0
      %v336 = vadd.f32 %v297, %v335
      %v337 = vand.u32 %v208, 4294901760
      %v338 = vsub.f32 %v208, %v337
      %339 = vmatmul.f32.gmra.mxu0 %v338
      %v340 = vpop.f32.mrf.mxu0
      %v341 = vadd.f32 %v301, %v340
      %v342 = vand.u32 %v211, 4294901760
      %v343 = vsub.f32 %v211, %v342
      %344 = vmatmul.f32.gmra.mxu0 %v343
      %v345 = vpop.f32.mrf.mxu0
      %v346 = vadd.f32 %v305, %v345
      %347 = vdwg.mxu0
      %348 = vmatpush.msra.mxu0 0.0
      %349 = vmatpush.msra.mxu0 0.0
      %350 = vmatpush.msra.mxu0 0.0
      %351 = vmatpush.msra.mxu0 0.0
      %352 = vmatpush.msra.mxu0 0.0
      %353 = vmatpush.msra.mxu0 0.0
      %354 = vmatpush.msra.mxu0 0.0
      %355 = vmatpush.msra.mxu0 0.0
      %356 = vmatpush.msra.mxu0 0.0
      %357 = vmatpush.msra.mxu0 0.0
      %358 = vmatpush.msra.mxu0 0.0
      %359 = vmatpush.msra.mxu0 0.0
      %360 = vmatpush.msra.mxu0 0.0
      %361 = vmatpush.msra.mxu0 0.0
      %v362 = vand.u32 %v199, 4294901760
      %363 = vmatpush.msra.mxu0 %v362
      %v364 = vand.u32 %v198, 4294901760
      %365 = vmatpush.msra.mxu0 %v364
      %v366 = vand.u32 %v202, 4294901760
      %v367 = vsub.f32 %v202, %v366
      %v368 = vand.u32 %v367, 4294901760
      %369 = vmatmul.f32.gmra.mxu0 %v368
      %v370 = vpop.f32.mrf.mxu0
      %v371 = vadd.f32 %v331, %v370
      %v372 = vand.u32 %v205, 4294901760
      %v373 = vsub.f32 %v205, %v372
      %v374 = vand.u32 %v373, 4294901760
      %375 = vmatmul.f32.gmra.mxu0 %v374
      %v376 = vpop.f32.mrf.mxu0
      %v377 = vadd.f32 %v336, %v376
      %v378 = vand.u32 %v208, 4294901760
      %v379 = vsub.f32 %v208, %v378
      %v380 = vand.u32 %v379, 4294901760
      %381 = vmatmul.f32.gmra.mxu0 %v380
      %v382 = vpop.f32.mrf.mxu0
      %v383 = vadd.f32 %v341, %v382
      %v384 = vand.u32 %v211, 4294901760
      %v385 = vsub.f32 %v211, %v384
      %v386 = vand.u32 %v385, 4294901760
      %387 = vmatmul.f32.gmra.mxu0 %v386
      %v388 = vpop.f32.mrf.mxu0
      %v389 = vadd.f32 %v346, %v388
      %390 = vdwg.mxu0
      %391 = vmatpush.msra.mxu0 0.0
      %392 = vmatpush.msra.mxu0 0.0
      %393 = vmatpush.msra.mxu0 0.0
      %394 = vmatpush.msra.mxu0 0.0
      %395 = vmatpush.msra.mxu0 0.0
      %396 = vmatpush.msra.mxu0 0.0
      %397 = vmatpush.msra.mxu0 0.0
      %398 = vmatpush.msra.mxu0 0.0
      %399 = vmatpush.msra.mxu0 0.0
      %400 = vmatpush.msra.mxu0 0.0
      %401 = vmatpush.msra.mxu0 0.0
      %402 = vmatpush.msra.mxu0 0.0
      %403 = vmatpush.msra.mxu0 0.0
      %404 = vmatpush.msra.mxu0 0.0
      %v405 = vand.u32 %v199, 4294901760
      %v406 = vsub.f32 %v199, %v405
      %v407 = vand.u32 %v406, 4294901760
      %408 = vmatpush.msra.mxu0 %v407
      %v409 = vand.u32 %v198, 4294901760
      %v410 = vsub.f32 %v198, %v409
      %v411 = vand.u32 %v410, 4294901760
      %412 = vmatpush.msra.mxu0 %v411
      %v413 = vand.u32 %v202, 4294901760
      %414 = vmatmul.f32.gmra.mxu0 %v413
      %v415 = vpop.f32.mrf.mxu0
      %v416 = vadd.f32 %v371, %v415
      %v417 = vand.u32 %v205, 4294901760
      %418 = vmatmul.f32.gmra.mxu0 %v417
      %v419 = vpop.f32.mrf.mxu0
      %v420 = vadd.f32 %v377, %v419
      %v421 = vand.u32 %v208, 4294901760
      %422 = vmatmul.f32.gmra.mxu0 %v421
      %v423 = vpop.f32.mrf.mxu0
      %v424 = vadd.f32 %v383, %v423
      %v425 = vand.u32 %v211, 4294901760
      %426 = vmatmul.f32.gmra.mxu0 %v425
      %v427 = vpop.f32.mrf.mxu0
      %v428 = vadd.f32 %v389, %v427
      %429 = vdwg.mxu0
      %430 = vmatpush.msra.mxu0 0.0
      %431 = vmatpush.msra.mxu0 0.0
      %432 = vmatpush.msra.mxu0 0.0
      %433 = vmatpush.msra.mxu0 0.0
      %434 = vmatpush.msra.mxu0 0.0
      %435 = vmatpush.msra.mxu0 0.0
      %436 = vmatpush.msra.mxu0 0.0
      %437 = vmatpush.msra.mxu0 0.0
      %438 = vmatpush.msra.mxu0 0.0
      %439 = vmatpush.msra.mxu0 0.0
      %440 = vmatpush.msra.mxu0 0.0
      %441 = vmatpush.msra.mxu0 0.0
      %442 = vmatpush.msra.mxu0 0.0
      %443 = vmatpush.msra.mxu0 0.0
      %v444 = vand.u32 %v199, 4294901760
      %445 = vmatpush.msra.mxu0 %v444
      %v446 = vand.u32 %v198, 4294901760
      %447 = vmatpush.msra.mxu0 %v446
      %v448 = vand.u32 %v202, 4294901760
      %449 = vmatmul.f32.gmra.mxu0 %v448
      %v450 = vpop.f32.mrf.mxu0
      %v451 = vadd.f32 %v416, %v450
      %v452 = vand.u32 %v205, 4294901760
      %453 = vmatmul.f32.gmra.mxu0 %v452
      %v454 = vpop.f32.mrf.mxu0
      %v455 = vadd.f32 %v420, %v454
      %v456 = vand.u32 %v208, 4294901760
      %457 = vmatmul.f32.gmra.mxu0 %v456
      %v458 = vpop.f32.mrf.mxu0
      %v459 = vadd.f32 %v424, %v458
      %v460 = vand.u32 %v211, 4294901760
      %461 = vmatmul.f32.gmra.mxu0 %v460
      %v462 = vpop.f32.mrf.mxu0
      %v463 = vadd.f32 %v428, %v462
      %464 = vdwg.mxu0
      %v465 = vld [vmem:[%s2] sm:$0xff]
      %v466 = vld [vmem:[%s2 + $0x8] sm:$0xff]
      %467 = vmatpush.msra.mxu0 0.0
      %468 = vmatpush.msra.mxu0 0.0
      %469 = vmatpush.msra.mxu0 0.0
      %470 = vmatpush.msra.mxu0 0.0
      %471 = vmatpush.msra.mxu0 0.0
      %472 = vmatpush.msra.mxu0 0.0
      %473 = vmatpush.msra.mxu0 0.0
      %474 = vmatpush.msra.mxu0 0.0
      %475 = vmatpush.msra.mxu0 0.0
      %476 = vmatpush.msra.mxu0 0.0
      %477 = vmatpush.msra.mxu0 0.0
      %478 = vmatpush.msra.mxu0 0.0
      %479 = vmatpush.msra.mxu0 0.0
      %480 = vmatpush.msra.mxu0 0.0
      %v481 = vand.u32 %v466, 4294901760
      %482 = vmatpush.msra.mxu0 %v481
      %v483 = vand.u32 %v465, 4294901760
      %484 = vmatpush.msra.mxu0 %v483
      %v485 = vand.u32 %v202, 4294901760
      %v486 = vsub.f32 %v202, %v485
      %v487 = vand.u32 %v486, 4294901760
      %v488 = vsub.f32 %v486, %v487
      %v489 = vand.u32 %v488, 4294901760
      %490 = vmatmul.f32.gmra.mxu0 %v489
      %v491 = vpop.f32.mrf.mxu0
      %v492 = vadd.f32 0.0, %v491
      %v493 = vand.u32 %v205, 4294901760
      %v494 = vsub.f32 %v205, %v493
      %v495 = vand.u32 %v494, 4294901760
      %v496 = vsub.f32 %v494, %v495
      %v497 = vand.u32 %v496, 4294901760
      %498 = vmatmul.f32.gmra.mxu0 %v497
      %v499 = vpop.f32.mrf.mxu0
      %v500 = vadd.f32 0.0, %v499
      %v501 = vand.u32 %v208, 4294901760
      %v502 = vsub.f32 %v208, %v501
      %v503 = vand.u32 %v502, 4294901760
      %v504 = vsub.f32 %v502, %v503
      %v505 = vand.u32 %v504, 4294901760
      %506 = vmatmul.f32.gmra.mxu0 %v505
      %v507 = vpop.f32.mrf.mxu0
      %v508 = vadd.f32 0.0, %v507
      %v509 = vand.u32 %v211, 4294901760
      %v510 = vsub.f32 %v211, %v509
      %v511 = vand.u32 %v510, 4294901760
      %v512 = vsub.f32 %v510, %v511
      %v513 = vand.u32 %v512, 4294901760
      %514 = vmatmul.f32.gmra.mxu0 %v513
      %v515 = vpop.f32.mrf.mxu0
      %v516 = vadd.f32 0.0, %v515
      %517 = vdwg.mxu0
      %518 = vmatpush.msra.mxu0 0.0
      %519 = vmatpush.msra.mxu0 0.0
      %520 = vmatpush.msra.mxu0 0.0
      %521 = vmatpush.msra.mxu0 0.0
      %522 = vmatpush.msra.mxu0 0.0
      %523 = vmatpush.msra.mxu0 0.0
      %524 = vmatpush.msra.mxu0 0.0
      %525 = vmatpush.msra.mxu0 0.0
      %526 = vmatpush.msra.mxu0 0.0
      %527 = vmatpush.msra.mxu0 0.0
      %528 = vmatpush.msra.mxu0 0.0
      %529 = vmatpush.msra.mxu0 0.0
      %530 = vmatpush.msra.mxu0 0.0
      %531 = vmatpush.msra.mxu0 0.0
      %v532 = vand.u32 %v466, 4294901760
      %v533 = vsub.f32 %v466, %v532
      %v534 = vand.u32 %v533, 4294901760
      %v535 = vsub.f32 %v533, %v534
      %v536 = vand.u32 %v535, 4294901760
      %537 = vmatpush.msra.mxu0 %v536
      %v538 = vand.u32 %v465, 4294901760
      %v539 = vsub.f32 %v465, %v538
      %v540 = vand.u32 %v539, 4294901760
      %v541 = vsub.f32 %v539, %v540
      %v542 = vand.u32 %v541, 4294901760
      %543 = vmatpush.msra.mxu0 %v542
      %v544 = vand.u32 %v202, 4294901760
      %545 = vmatmul.f32.gmra.mxu0 %v544
      %v546 = vpop.f32.mrf.mxu0
      %v547 = vadd.f32 %v492, %v546
      %v548 = vand.u32 %v205, 4294901760
      %549 = vmatmul.f32.gmra.mxu0 %v548
      %v550 = vpop.f32.mrf.mxu0
      %v551 = vadd.f32 %v500, %v550
      %v552 = vand.u32 %v208, 4294901760
      %553 = vmatmul.f32.gmra.mxu0 %v552
      %v554 = vpop.f32.mrf.mxu0
      %v555 = vadd.f32 %v508, %v554
      %v556 = vand.u32 %v211, 4294901760
      %557 = vmatmul.f32.gmra.mxu0 %v556
      %v558 = vpop.f32.mrf.mxu0
      %v559 = vadd.f32 %v516, %v558
      %560 = vdwg.mxu0
      %561 = vmatpush.msra.mxu0 0.0
      %562 = vmatpush.msra.mxu0 0.0
      %563 = vmatpush.msra.mxu0 0.0
      %564 = vmatpush.msra.mxu0 0.0
      %565 = vmatpush.msra.mxu0 0.0
      %566 = vmatpush.msra.mxu0 0.0
      %567 = vmatpush.msra.mxu0 0.0
      %568 = vmatpush.msra.mxu0 0.0
      %569 = vmatpush.msra.mxu0 0.0
      %570 = vmatpush.msra.mxu0 0.0
      %571 = vmatpush.msra.mxu0 0.0
      %572 = vmatpush.msra.mxu0 0.0
      %573 = vmatpush.msra.mxu0 0.0
      %574 = vmatpush.msra.mxu0 0.0
      %v575 = vand.u32 %v466, 4294901760
      %v576 = vsub.f32 %v466, %v575
      %577 = vmatpush.msra.mxu0 %v576
      %v578 = vand.u32 %v465, 4294901760
      %v579 = vsub.f32 %v465, %v578
      %580 = vmatpush.msra.mxu0 %v579
      %v581 = vand.u32 %v202, 4294901760
      %v582 = vsub.f32 %v202, %v581
      %583 = vmatmul.f32.gmra.mxu0 %v582
      %v584 = vpop.f32.mrf.mxu0
      %v585 = vadd.f32 %v547, %v584
      %v586 = vand.u32 %v205, 4294901760
      %v587 = vsub.f32 %v205, %v586
      %588 = vmatmul.f32.gmra.mxu0 %v587
      %v589 = vpop.f32.mrf.mxu0
      %v590 = vadd.f32 %v551, %v589
      %v591 = vand.u32 %v208, 4294901760
      %v592 = vsub.f32 %v208, %v591
      %593 = vmatmul.f32.gmra.mxu0 %v592
      %v594 = vpop.f32.mrf.mxu0
      %v595 = vadd.f32 %v555, %v594
      %v596 = vand.u32 %v211, 4294901760
      %v597 = vsub.f32 %v211, %v596
      %598 = vmatmul.f32.gmra.mxu0 %v597
      %v599 = vpop.f32.mrf.mxu0
      %v600 = vadd.f32 %v559, %v599
      %601 = vdwg.mxu0
      %602 = vmatpush.msra.mxu0 0.0
      %603 = vmatpush.msra.mxu0 0.0
      %604 = vmatpush.msra.mxu0 0.0
      %605 = vmatpush.msra.mxu0 0.0
      %606 = vmatpush.msra.mxu0 0.0
      %607 = vmatpush.msra.mxu0 0.0
      %608 = vmatpush.msra.mxu0 0.0
      %609 = vmatpush.msra.mxu0 0.0
      %610 = vmatpush.msra.mxu0 0.0
      %611 = vmatpush.msra.mxu0 0.0
      %612 = vmatpush.msra.mxu0 0.0
      %613 = vmatpush.msra.mxu0 0.0
      %614 = vmatpush.msra.mxu0 0.0
      %615 = vmatpush.msra.mxu0 0.0
      %v616 = vand.u32 %v466, 4294901760
      %617 = vmatpush.msra.mxu0 %v616
      %v618 = vand.u32 %v465, 4294901760
      %619 = vmatpush.msra.mxu0 %v618
      %v620 = vand.u32 %v202, 4294901760
      %v621 = vsub.f32 %v202, %v620
      %v622 = vand.u32 %v621, 4294901760
      %623 = vmatmul.f32.gmra.mxu0 %v622
      %v624 = vpop.f32.mrf.mxu0
      %v625 = vadd.f32 %v585, %v624
      %v626 = vand.u32 %v205, 4294901760
      %v627 = vsub.f32 %v205, %v626
      %v628 = vand.u32 %v627, 4294901760
      %629 = vmatmul.f32.gmra.mxu0 %v628
      %v630 = vpop.f32.mrf.mxu0
      %v631 = vadd.f32 %v590, %v630
      %v632 = vand.u32 %v208, 4294901760
      %v633 = vsub.f32 %v208, %v632
      %v634 = vand.u32 %v633, 4294901760
      %635 = vmatmul.f32.gmra.mxu0 %v634
      %v636 = vpop.f32.mrf.mxu0
      %v637 = vadd.f32 %v595, %v636
      %v638 = vand.u32 %v211, 4294901760
      %v639 = vsub.f32 %v211, %v638
      %v640 = vand.u32 %v639, 4294901760
      %641 = vmatmul.f32.gmra.mxu0 %v640
      %v642 = vpop.f32.mrf.mxu0
      %v643 = vadd.f32 %v600, %v642
      %644 = vdwg.mxu0
      %645 = vmatpush.msra.mxu0 0.0
      %646 = vmatpush.msra.mxu0 0.0
      %647 = vmatpush.msra.mxu0 0.0
      %648 = vmatpush.msra.mxu0 0.0
      %649 = vmatpush.msra.mxu0 0.0
      %650 = vmatpush.msra.mxu0 0.0
      %651 = vmatpush.msra.mxu0 0.0
      %652 = vmatpush.msra.mxu0 0.0
      %653 = vmatpush.msra.mxu0 0.0
      %654 = vmatpush.msra.mxu0 0.0
      %655 = vmatpush.msra.mxu0 0.0
      %656 = vmatpush.msra.mxu0 0.0
      %657 = vmatpush.msra.mxu0 0.0
      %658 = vmatpush.msra.mxu0 0.0
      %v659 = vand.u32 %v466, 4294901760
      %v660 = vsub.f32 %v466, %v659
      %v661 = vand.u32 %v660, 4294901760
      %662 = vmatpush.msra.mxu0 %v661
      %v663 = vand.u32 %v465, 4294901760
      %v664 = vsub.f32 %v465, %v663
      %v665 = vand.u32 %v664, 4294901760
      %666 = vmatpush.msra.mxu0 %v665
      %v667 = vand.u32 %v202, 4294901760
      %668 = vmatmul.f32.gmra.mxu0 %v667
      %v669 = vpop.f32.mrf.mxu0
      %v670 = vadd.f32 %v625, %v669
      %v671 = vand.u32 %v205, 4294901760
      %672 = vmatmul.f32.gmra.mxu0 %v671
      %v673 = vpop.f32.mrf.mxu0
      %v674 = vadd.f32 %v631, %v673
      %v675 = vand.u32 %v208, 4294901760
      %676 = vmatmul.f32.gmra.mxu0 %v675
      %v677 = vpop.f32.mrf.mxu0
      %v678 = vadd.f32 %v637, %v677
      %v679 = vand.u32 %v211, 4294901760
      %680 = vmatmul.f32.gmra.mxu0 %v679
      %v681 = vpop.f32.mrf.mxu0
      %v682 = vadd.f32 %v643, %v681
      %683 = vdwg.mxu0
      %684 = vmatpush.msra.mxu0 0.0
      %685 = vmatpush.msra.mxu0 0.0
      %686 = vmatpush.msra.mxu0 0.0
      %687 = vmatpush.msra.mxu0 0.0
      %688 = vmatpush.msra.mxu0 0.0
      %689 = vmatpush.msra.mxu0 0.0
      %690 = vmatpush.msra.mxu0 0.0
      %691 = vmatpush.msra.mxu0 0.0
      %692 = vmatpush.msra.mxu0 0.0
      %693 = vmatpush.msra.mxu0 0.0
      %694 = vmatpush.msra.mxu0 0.0
      %695 = vmatpush.msra.mxu0 0.0
      %696 = vmatpush.msra.mxu0 0.0
      %697 = vmatpush.msra.mxu0 0.0
      %v698 = vand.u32 %v466, 4294901760
      %699 = vmatpush.msra.mxu0 %v698
      %v700 = vand.u32 %v465, 4294901760
      %701 = vmatpush.msra.mxu0 %v700
      %v702 = vand.u32 %v202, 4294901760
      %703 = vmatmul.f32.gmra.mxu0 %v702
      %v704 = vpop.f32.mrf.mxu0
      %v705 = vadd.f32 %v670, %v704
      %v706 = vand.u32 %v205, 4294901760
      %707 = vmatmul.f32.gmra.mxu0 %v706
      %v708 = vpop.f32.mrf.mxu0
      %v709 = vadd.f32 %v674, %v708
      %v710 = vand.u32 %v208, 4294901760
      %711 = vmatmul.f32.gmra.mxu0 %v710
      %v712 = vpop.f32.mrf.mxu0
      %v713 = vadd.f32 %v678, %v712
      %v714 = vand.u32 %v211, 4294901760
      %715 = vmatmul.f32.gmra.mxu0 %v714
      %v716 = vpop.f32.mrf.mxu0
      %v717 = vadd.f32 %v682, %v716
      %718 = vdwg.mxu0
      %v719 = vmax.f32 %v451, %v705
      %v720 = vmax.f32 %v455, %v709
      %v721 = vmax.f32 %v459, %v713
      %v722 = vmax.f32 %v463, %v717
      %vm723 = vcmask 64512
      %724 = vst.msk [vmem:[%s172] sm:$0xff] %vm723, %v719
      %725 = vst.msk [vmem:[%s172 + $0x8] sm:$0xff] %vm723, %v720
      %726 = vst.msk [vmem:[%s172 + $0x10] sm:$0xff] %vm723, %v721
      %727 = vst.msk [vmem:[%s172 + $0x18] sm:$0xff] %vm723, %v722
      %s728 = smul.u32 4, %s14
      %p729 = scmp.lt.s32.totalorder %s728, 7
      %s730 = scalar_select %p729, %s728, 7
      %s731 = smul.addr %s730, 8
      %s732 = scalar_lea.vmem %s3, %s731
      // Predicated region
      $region33: #{tpu_custom_call.1} parent=31 // pred_check
        %p733 = pneg %p100
      $region34: #{tpu_custom_call.1} parent=31 // pred_check_branch
        %735 = sbr.rel (%p733) target = $region36
      $region35: #{tpu_custom_call.1} parent=31 // pred_region
        %s736 = smul.u32 4, %s14
      $region36: #{tpu_custom_call.1} parent=31 // pred_fallthru
        _
    $region32: #{tpu_custom_call.1} parent=5 // pred_fallthru
      _
    %p737 = scmp.le.s32.totalorder 2, %s9
    // Predicated region
    $region37: #{tpu_custom_call.1} parent=5 // pred_check
      %p738 = pneg %p737
    $region38: #{tpu_custom_call.1} parent=5 // pred_check_branch
      %740 = sbr.rel (%p738) target = $region40
    $region39: #{tpu_custom_call.1} parent=5 // pred_region
      %s741 = ssub.s32 %s9, 2
      // Predicated region
      $region41: #{tpu_custom_call.1} parent=39 // pred_check
        %p742 = pneg %p106
      $region42: #{tpu_custom_call.1} parent=39 // pred_check_branch
        %744 = sbr.rel (%p742) target = $region44
      $region43: #{tpu_custom_call.1} parent=39 // pred_region
        %s745 = smul.u32 4, %s15
        %p746 = scmp.lt.s32.totalorder %s745, 7
        %s747 = scalar_select %p746, %s745, 7
        %s748 = smul.addr %s747, 8
        %s749 = scalar_lea.vmem %s3, %s748
      $region44: #{tpu_custom_call.1} parent=39 // pred_fallthru
        _
    $region40: #{tpu_custom_call.1} parent=5 // pred_fallthru
      _
  $region6: #{tpu_custom_call.1} parent=0 // loop_footer
    %s13 = sadd.s32 1, %s9
  $region7: #{tpu_custom_call.1} parent=0 // loop_footer_branch
    %8 = sbr.rel target = $region3
  $region8: #{tpu_custom_call.1} parent=0 // loop_exit
    _

</llo_original>
